<compile_context>
chip_gen: v7x
topology: tpu7x:2x2x1
jax: 0.10.0
libtpu: 0.0.40
codegen_flags: <defaults>
</compile_context>

<pallas_src>
import functools

import jax
import jax.numpy as jnp
from jax.experimental import pallas as pl
from jax.experimental.pallas import tpu as pltpu


def _round_up(x, m):
    return ((x + m - 1) // m) * m


def _mlp_kernel(x_ref,
                w0_ref, b0_ref,
                w1_ref, b1_ref,
                w2_ref, b2_ref,
                w3_ref, b3_ref,
                wo_ref, bo_ref,
                o_ref,
                *, input_dim):
    """Batch-major fused forward.  Activations are (features, TM): batch on lanes."""
    x = x_ref[...]                                         # (input_dim, TM)

    if input_dim == 1:
        # K=1 first layer: outer-product broadcast on the VPU, skip the MXU pass.
        h = jnp.maximum(w0_ref[...] * x + b0_ref[...], 0.0)
    else:
        h = jnp.maximum(
            jnp.dot(w0_ref[...], x, preferred_element_type=jnp.float32) + b0_ref[...],
            0.0)

    h = jnp.maximum(
        jnp.dot(w1_ref[...], h, preferred_element_type=jnp.float32) + b1_ref[...], 0.0)
    h = jnp.maximum(
        jnp.dot(w2_ref[...], h, preferred_element_type=jnp.float32) + b2_ref[...], 0.0)
    h = jnp.maximum(
        jnp.dot(w3_ref[...], h, preferred_element_type=jnp.float32) + b3_ref[...], 0.0)

    o_ref[...] = (
        jnp.dot(wo_ref[...], h, preferred_element_type=jnp.float32) + bo_ref[...]
    ).astype(o_ref.dtype)


@functools.partial(jax.jit, static_argnames=("tile_m",))
def net_forward(x, params, *, tile_m=512):
    """x: (N, input_dim) f32.
    params: flat tuple (W0, b0, ..., Wout, bout) with W: (out_features, in_features)
    (PyTorch nn.Linear layout) and b: (out_features, 1)."""
    n, input_dim = x.shape
    output_dim = params[-2].shape[0]

    # Batch goes on the lane (last) axis: pad N up to a multiple of a 128-aligned tile.
    tm = min(tile_m, _round_up(max(n, 1), 128))
    n_pad = _round_up(n, tm)

    xt = jnp.pad(x.T, ((0, 0), (0, n_pad - n)))            # (input_dim, n_pad)

    grid = (n_pad // tm,)

    # Weights/biases: full-array blocks, constant index map -> resident in VMEM
    # for the whole grid.
    weight_specs = [pl.BlockSpec(p.shape, lambda i: (0, 0)) for p in params]
    in_specs = [pl.BlockSpec((input_dim, tm), lambda i: (0, i))] + weight_specs
    out_spec = pl.BlockSpec((output_dim, tm), lambda i: (0, i))

    kernel = functools.partial(_mlp_kernel, input_dim=input_dim)

    out_t = pl.pallas_call(
        kernel,
        out_shape=jax.ShapeDtypeStruct((output_dim, n_pad), jnp.float32),
        grid=grid,
        in_specs=in_specs,
        out_specs=out_spec,
        compiler_params=pltpu.CompilerParams(
            dimension_semantics=("parallel",)),
    )(xt, *params)

    return out_t.T[:n]                                     # back to (N, output_dim)


def init_params(key, input_dim, output_dim, n_units):
    """PyTorch nn.Linear-style init (uniform +/- 1/sqrt(fan_in)), PyTorch weight layout."""
    dims = [(input_dim, n_units),
            (n_units, n_units),
            (n_units, n_units),
            (n_units, n_units),
            (n_units, output_dim)]
    params = []
    for fan_in, fan_out in dims:
        key, kw, kb = jax.random.split(key, 3)
        bound = 1.0 / jnp.sqrt(jnp.float32(fan_in))
        w = jax.random.uniform(kw, (fan_out, fan_in), jnp.float32, -bound, bound)
        b = jax.random.uniform(kb, (fan_out, 1), jnp.float32, -bound, bound)
        params += [w, b]
    return tuple(params)


def reference_forward(x, params):
    """Plain-JAX reference (standard row-major batch layout)."""
    h = x
    for i in range(4):
        w, b = params[2 * i], params[2 * i + 1]
        h = jnp.maximum(h @ w.T + b.T, 0.0)
    wo, bo = params[8], params[9]
    return h @ wo.T + bo.T


# TODO(synk): Net.fit()/predict() training loop (Adam optimizer, MSE loss) is host-side
# training logic and is not translated; only the forward pass is implemented here.


if __name__ == "__main__":
    # Cooling PINN: 1-D input (time), 1-D output (temperature), small hidden width.
    input_dim, output_dim, n_units = 1, 1, 32
    batch = 300  # not a multiple of the tile -> exercises padding and a multi-step grid

    key = jax.random.PRNGKey(0)
    key, kx = jax.random.split(key)
    x = jax.random.uniform(kx, (batch, input_dim), jnp.float32, 0.0, 10.0)

    params = init_params(jax.random.PRNGKey(0), input_dim, output_dim, n_units)

    # Small tile so the grid has >1 step at this toy batch size; realistic PINN
    # collocation batches would use the default tile_m=512.
    out = net_forward(x, params, tile_m=128)
    out = jax.block_until_ready(out)

    ref = reference_forward(x, params)
    assert out.shape == (batch, output_dim), out.shape
    assert jnp.allclose(out, ref, atol=1e-5, rtol=1e-5), "mismatch vs reference"

    print("KERNEL_OK")
</pallas_src>

<mosaic_0001>
module attributes {stable_mosaic.version = 11 : i64} {
  func.func @_mlp_kernel(%arg0: i32, %arg1: memref<1x128xf32, #tpu.memory_space<vmem>>, %arg2: memref<32x1xf32, #tpu.memory_space<vmem>>, %arg3: memref<32x1xf32, #tpu.memory_space<vmem>>, %arg4: memref<32x32xf32, #tpu.memory_space<vmem>>, %arg5: memref<32x1xf32, #tpu.memory_space<vmem>>, %arg6: memref<32x32xf32, #tpu.memory_space<vmem>>, %arg7: memref<32x1xf32, #tpu.memory_space<vmem>>, %arg8: memref<32x32xf32, #tpu.memory_space<vmem>>, %arg9: memref<32x1xf32, #tpu.memory_space<vmem>>, %arg10: memref<1x32xf32, #tpu.memory_space<vmem>>, %arg11: memref<1x1xf32, #tpu.memory_space<vmem>>, %arg12: memref<1x128xf32, #tpu.memory_space<vmem>>) attributes {dimension_semantics = [#tpu.dimension_semantics<parallel>], iteration_bounds = array<i64: 3>, scalar_prefetch = 0 : i64, scratch_operands = 0 : i64, tpu.core_type = #tpu.core_type<tc>, window_params = [{transform_indices = @transform_0, window_bounds = array<i64: 1, 128>}, {pipeline_mode = #tpu.pipeline_mode<synchronous>, transform_indices = @transform_1, window_bounds = array<i64: 32, 1>}, {pipeline_mode = #tpu.pipeline_mode<synchronous>, transform_indices = @transform_2, window_bounds = array<i64: 32, 1>}, {pipeline_mode = #tpu.pipeline_mode<synchronous>, transform_indices = @transform_3, window_bounds = array<i64: 32, 32>}, {pipeline_mode = #tpu.pipeline_mode<synchronous>, transform_indices = @transform_4, window_bounds = array<i64: 32, 1>}, {pipeline_mode = #tpu.pipeline_mode<synchronous>, transform_indices = @transform_5, window_bounds = array<i64: 32, 32>}, {pipeline_mode = #tpu.pipeline_mode<synchronous>, transform_indices = @transform_6, window_bounds = array<i64: 32, 1>}, {pipeline_mode = #tpu.pipeline_mode<synchronous>, transform_indices = @transform_7, window_bounds = array<i64: 32, 32>}, {pipeline_mode = #tpu.pipeline_mode<synchronous>, transform_indices = @transform_8, window_bounds = array<i64: 32, 1>}, {pipeline_mode = #tpu.pipeline_mode<synchronous>, transform_indices = @transform_9, window_bounds = array<i64: 1, 32>}, {pipeline_mode = #tpu.pipeline_mode<synchronous>, transform_indices = @transform_10, window_bounds = array<i64: 1, 1>}, {transform_indices = @transform_11, window_bounds = array<i64: 1, 128>}]} {
    %c0 = arith.constant 0 : index
    %c0_0 = arith.constant 0 : index
    %0 = vector.load %arg1[%c0, %c0_0] : memref<1x128xf32, #tpu.memory_space<vmem>>, vector<1x128xf32>
    %c0_1 = arith.constant 0 : index
    %c0_2 = arith.constant 0 : index
    %1 = vector.load %arg2[%c0_1, %c0_2] : memref<32x1xf32, #tpu.memory_space<vmem>>, vector<32x1xf32>
    %2 = vector.broadcast %1 : vector<32x1xf32> to vector<32x128xf32>
    %3 = vector.broadcast %0 : vector<1x128xf32> to vector<32x128xf32>
    %4 = arith.mulf %2, %3 : vector<32x128xf32>
    %c0_3 = arith.constant 0 : index
    %c0_4 = arith.constant 0 : index
    %5 = vector.load %arg3[%c0_3, %c0_4] : memref<32x1xf32, #tpu.memory_space<vmem>>, vector<32x1xf32>
    %6 = vector.broadcast %5 : vector<32x1xf32> to vector<32x128xf32>
    %7 = arith.addf %4, %6 : vector<32x128xf32>
    %cst = arith.constant 0.000000e+00 : f32
    %8 = vector.broadcast %cst : f32 to vector<32x128xf32>
    %9 = arith.maximumf %7, %8 : vector<32x128xf32>
    %c0_5 = arith.constant 0 : index
    %c0_6 = arith.constant 0 : index
    %10 = vector.load %arg4[%c0_5, %c0_6] : memref<32x32xf32, #tpu.memory_space<vmem>>, vector<32x32xf32>
    %cst_7 = arith.constant dense<0.000000e+00> : vector<32x128xf32>
    %11 = tpu.matmul %10, %9, %cst_7 {dimension_numbers = #tpu.dot_dimension_numbers<[1], [0], [0], [1], [0, 0, 1, 1], [], []>} : vector<32x32xf32>, vector<32x128xf32>, vector<32x128xf32> -> vector<32x128xf32>
    %c0_8 = arith.constant 0 : index
    %c0_9 = arith.constant 0 : index
    %12 = vector.load %arg5[%c0_8, %c0_9] : memref<32x1xf32, #tpu.memory_space<vmem>>, vector<32x1xf32>
    %13 = vector.broadcast %12 : vector<32x1xf32> to vector<32x128xf32>
    %14 = arith.addf %11, %13 : vector<32x128xf32>
    %cst_10 = arith.constant 0.000000e+00 : f32
    %15 = vector.broadcast %cst_10 : f32 to vector<32x128xf32>
    %16 = arith.maximumf %14, %15 : vector<32x128xf32>
    %c0_11 = arith.constant 0 : index
    %c0_12 = arith.constant 0 : index
    %17 = vector.load %arg6[%c0_11, %c0_12] : memref<32x32xf32, #tpu.memory_space<vmem>>, vector<32x32xf32>
    %cst_13 = arith.constant dense<0.000000e+00> : vector<32x128xf32>
    %18 = tpu.matmul %17, %16, %cst_13 {dimension_numbers = #tpu.dot_dimension_numbers<[1], [0], [0], [1], [0, 0, 1, 1], [], []>} : vector<32x32xf32>, vector<32x128xf32>, vector<32x128xf32> -> vector<32x128xf32>
    %c0_14 = arith.constant 0 : index
    %c0_15 = arith.constant 0 : index
    %19 = vector.load %arg7[%c0_14, %c0_15] : memref<32x1xf32, #tpu.memory_space<vmem>>, vector<32x1xf32>
    %20 = vector.broadcast %19 : vector<32x1xf32> to vector<32x128xf32>
    %21 = arith.addf %18, %20 : vector<32x128xf32>
    %cst_16 = arith.constant 0.000000e+00 : f32
    %22 = vector.broadcast %cst_16 : f32 to vector<32x128xf32>
    %23 = arith.maximumf %21, %22 : vector<32x128xf32>
    %c0_17 = arith.constant 0 : index
    %c0_18 = arith.constant 0 : index
    %24 = vector.load %arg8[%c0_17, %c0_18] : memref<32x32xf32, #tpu.memory_space<vmem>>, vector<32x32xf32>
    %cst_19 = arith.constant dense<0.000000e+00> : vector<32x128xf32>
    %25 = tpu.matmul %24, %23, %cst_19 {dimension_numbers = #tpu.dot_dimension_numbers<[1], [0], [0], [1], [0, 0, 1, 1], [], []>} : vector<32x32xf32>, vector<32x128xf32>, vector<32x128xf32> -> vector<32x128xf32>
    %c0_20 = arith.constant 0 : index
    %c0_21 = arith.constant 0 : index
    %26 = vector.load %arg9[%c0_20, %c0_21] : memref<32x1xf32, #tpu.memory_space<vmem>>, vector<32x1xf32>
    %27 = vector.broadcast %26 : vector<32x1xf32> to vector<32x128xf32>
    %28 = arith.addf %25, %27 : vector<32x128xf32>
    %cst_22 = arith.constant 0.000000e+00 : f32
    %29 = vector.broadcast %cst_22 : f32 to vector<32x128xf32>
    %30 = arith.maximumf %28, %29 : vector<32x128xf32>
    %c0_23 = arith.constant 0 : index
    %c0_24 = arith.constant 0 : index
    %31 = vector.load %arg10[%c0_23, %c0_24] : memref<1x32xf32, #tpu.memory_space<vmem>>, vector<1x32xf32>
    %cst_25 = arith.constant dense<0.000000e+00> : vector<1x128xf32>
    %32 = tpu.matmul %31, %30, %cst_25 {dimension_numbers = #tpu.dot_dimension_numbers<[1], [0], [0], [1], [0, 0, 1, 1], [], []>} : vector<1x32xf32>, vector<32x128xf32>, vector<1x128xf32> -> vector<1x128xf32>
    %c0_26 = arith.constant 0 : index
    %c0_27 = arith.constant 0 : index
    %33 = vector.load %arg11[%c0_26, %c0_27] : memref<1x1xf32, #tpu.memory_space<vmem>>, vector<1x1xf32>
    %34 = vector.broadcast %33 : vector<1x1xf32> to vector<1x128xf32>
    %35 = arith.addf %32, %34 : vector<1x128xf32>
    %c0_28 = arith.constant 0 : index
    %c0_29 = arith.constant 0 : index
    %36 = vector.load %arg12[%c0_28, %c0_29] : memref<1x128xf32, #tpu.memory_space<vmem>>, vector<1x128xf32>
    tpu.vector_store %arg12[%c0_28, %c0_29], %35 {strides = array<i32>} : memref<1x128xf32, #tpu.memory_space<vmem>>, vector<1x128xf32>,
    return
  }
  func.func @transform_0(%arg0: i32) -> (i32, i32) {
    %c0_i32 = arith.constant 0 : i32
    %c0_i32_0 = arith.constant 0 : i32
    return %c0_i32, %arg0 : i32, i32
  }
  func.func @transform_1(%arg0: i32) -> (i32, i32) {
    %c0_i32 = arith.constant 0 : i32
    %c0_i32_0 = arith.constant 0 : i32
    %c0_i32_1 = arith.constant 0 : i32
    return %c0_i32, %c0_i32_0 : i32, i32
  }
  func.func @transform_2(%arg0: i32) -> (i32, i32) {
    %c0_i32 = arith.constant 0 : i32
    %c0_i32_0 = arith.constant 0 : i32
    %c0_i32_1 = arith.constant 0 : i32
    return %c0_i32, %c0_i32_0 : i32, i32
  }
  func.func @transform_3(%arg0: i32) -> (i32, i32) {
    %c0_i32 = arith.constant 0 : i32
    %c0_i32_0 = arith.constant 0 : i32
    %c0_i32_1 = arith.constant 0 : i32
    return %c0_i32, %c0_i32_0 : i32, i32
  }
  func.func @transform_4(%arg0: i32) -> (i32, i32) {
    %c0_i32 = arith.constant 0 : i32
    %c0_i32_0 = arith.constant 0 : i32
    %c0_i32_1 = arith.constant 0 : i32
    return %c0_i32, %c0_i32_0 : i32, i32
  }
  func.func @transform_5(%arg0: i32) -> (i32, i32) {
    %c0_i32 = arith.constant 0 : i32
    %c0_i32_0 = arith.constant 0 : i32
    %c0_i32_1 = arith.constant 0 : i32
    return %c0_i32, %c0_i32_0 : i32, i32
  }
  func.func @transform_6(%arg0: i32) -> (i32, i32) {
    %c0_i32 = arith.constant 0 : i32
    %c0_i32_0 = arith.constant 0 : i32
    %c0_i32_1 = arith.constant 0 : i32
    return %c0_i32, %c0_i32_0 : i32, i32
  }
  func.func @transform_7(%arg0: i32) -> (i32, i32) {
    %c0_i32 = arith.constant 0 : i32
    %c0_i32_0 = arith.constant 0 : i32
    %c0_i32_1 = arith.constant 0 : i32
    return %c0_i32, %c0_i32_0 : i32, i32
  }
  func.func @transform_8(%arg0: i32) -> (i32, i32) {
    %c0_i32 = arith.constant 0 : i32
    %c0_i32_0 = arith.constant 0 : i32
    %c0_i32_1 = arith.constant 0 : i32
    return %c0_i32, %c0_i32_0 : i32, i32
  }
  func.func @transform_9(%arg0: i32) -> (i32, i32) {
    %c0_i32 = arith.constant 0 : i32
    %c0_i32_0 = arith.constant 0 : i32
    %c0_i32_1 = arith.constant 0 : i32
    return %c0_i32, %c0_i32_0 : i32, i32
  }
  func.func @transform_10(%arg0: i32) -> (i32, i32) {
    %c0_i32 = arith.constant 0 : i32
    %c0_i32_0 = arith.constant 0 : i32
    %c0_i32_1 = arith.constant 0 : i32
    return %c0_i32, %c0_i32_0 : i32, i32
  }
  func.func @transform_11(%arg0: i32) -> (i32, i32) {
    %c0_i32 = arith.constant 0 : i32
    %c0_i32_0 = arith.constant 0 : i32
    return %c0_i32, %arg0 : i32, i32
  }
}

</mosaic_0001>

<llo_original>
// kernel: net_forward.1
$region0: #{net_forward.1}
  #allocation0 [shape = 'u32[]', space=smem, size = 0x4, offset = 0x4, fixed_abs, tag = 'smem constant byte address 0x4 - core index']
  #allocation1 [shape = 'u32[144,128]{1,0:T(1,128)}', space=vmem, size = 0x12000, scoped, tag = 'internal scratch']
  #allocation2 [shape = 'f32[1,1]{1,0:T(1,128)S(1)}', space=vmem, size = 0x200, scoped, tag = 'scoped memory for net_forward.1']
  %s0 = inlined_call_operand.vmem [shape: f32[1,384], index: 0, kind: input, shape index: {}]
  %s1 = inlined_call_operand.vmem [shape: f32[32,1], index: 1, kind: input, shape index: {}]
  %s2 = inlined_call_operand.vmem [shape: f32[32,1], index: 2, kind: input, shape index: {}]
  %s3 = inlined_call_operand.vmem [shape: f32[32,32], index: 3, kind: input, shape index: {}]
  %s4 = inlined_call_operand.vmem [shape: f32[32,1], index: 4, kind: input, shape index: {}]
  %s5 = inlined_call_operand.vmem [shape: f32[32,32], index: 5, kind: input, shape index: {}]
  %s6 = inlined_call_operand.vmem [shape: f32[32,1], index: 6, kind: input, shape index: {}]
  %s7 = inlined_call_operand.vmem [shape: f32[32,32], index: 7, kind: input, shape index: {}]
  %s8 = inlined_call_operand.vmem [shape: f32[32,1], index: 8, kind: input, shape index: {}]
  %s9 = inlined_call_operand.vmem [shape: f32[1,32], index: 9, kind: input, shape index: {}]
  %s10 = inlined_call_operand.<no memory space> [shape: f32[1,1], index: 10, kind: input, shape index: {}]
  %s11 = inlined_call_operand.vmem [shape: f32[1,384], index: 11, kind: output, shape index: {}]
  %s12 = sld [smem:[#allocation0]]
  $region77: #{net_forward.1} parent=0
    _
  %s14 = ssub.s32 1, %s12
  %s15 = scalar_select 0, %s14, %s12
  %v16 = vstv %s10
  %17 = vst [vmem:[#allocation2] sm:$0x1] %v16
  loop: start=0, step=1, limit=5
  $region2: #{net_forward.1} parent=0 // loop_pre_header
    _
  $region3: #{net_forward.1} parent=0 // loop_header
    %s19 = sphi 0, %s23
    %p20 = scmp.ge.s32.totalorder %s19, 5
    %s29 = sphi 0, %s31
    %s32 = sphi 0, %s29
    %s33 = sphi 0, %s32
    %s49 = sphi 0, %s33
    %s53 = sphi 0, %s53
    %s55 = sphi 0, %s53
    %s56 = sphi 0, %s55
    %s70 = sphi 0, %s56
    %s74 = sphi 0, %s74
    %s76 = sphi 0, %s74
    %s77 = sphi 0, %s76
    %s91 = sphi 0, %s77
    %s95 = sphi 0, %s95
    %s97 = sphi 0, %s95
    %s98 = sphi 0, %s97
    %s112 = sphi 0, %s98
    %s116 = sphi 0, %s116
    %s118 = sphi 0, %s116
    %s119 = sphi 0, %s118
    %s133 = sphi 0, %s119
    %s137 = sphi 0, %s137
    %s139 = sphi 0, %s137
    %s140 = sphi 0, %s139
    %s154 = sphi 0, %s140
    %s158 = sphi 0, %s158
    %s160 = sphi 0, %s158
    %s161 = sphi 0, %s160
    %s175 = sphi 0, %s161
    %s179 = sphi 0, %s179
    %s181 = sphi 0, %s179
    %s182 = sphi 0, %s181
    %s196 = sphi 0, %s182
    %s200 = sphi 0, %s200
    %s202 = sphi 0, %s200
    %s203 = sphi 0, %s202
    %s217 = sphi 0, %s203
    %s221 = sphi 0, %s221
    %s223 = sphi 0, %s221
    %s224 = sphi 0, %s223
    %s238 = sphi 0, %s224
    %s242 = sphi 0, %s242
    %s244 = sphi 0, %s242
    %s245 = sphi 0, %s244
    %s259 = sphi 0, %s245
    %s265 = sphi 0, %s267
    %s268 = sphi 0, %s265
    %s269 = sphi 0, %s268
    %s285 = sphi 0, %s269
  $region4: #{net_forward.1} parent=0 // loop_header_branch
    %22 = sbr.rel (%p20) target = $region8
  $region5: #{net_forward.1} parent=0 // loop_body
    %s24 = ssub.s32 %s19, 1
    %s25 = ssub.s32 %s19, 2
    %s26 = sadd.s32 %s19, 1
    %s27 = ssub.s32 %s19, %s26
    %p28 = scmp.eq.s32.totalorder %s27, 0
    %s30 = sadd.s32 %s29, 1
    %s31 = scalar_select %p28, %s29, %s30
    %p34 = pneg %p28
    %p35 = scmp.eq.s32.totalorder %s19, 2
    %p36 = por %p34, %p35
    %p37 = scmp.ne.s32.totalorder %s29, %s32
    %p38 = scmp.eq.s32.totalorder %s19, 0
    %p39 = por %p37, %p38
    %p40 = scmp.ne.s32.totalorder %s29, %s32
    %p41 = scmp.eq.s32.totalorder %s24, 2
    %p42 = por %p40, %p41
    %p43 = scmp.ne.s32.totalorder %s32, %s33
    %p44 = scmp.eq.s32.totalorder %s24, 0
    %p45 = por %p43, %p44
    %p46 = scmp.ne.s32.totalorder %s32, %s33
    %p47 = scmp.eq.s32.totalorder %s25, 2
    %p48 = por %p46, %p47
    %p50 = scmp.ne.s32.totalorder %s33, %s49
    %p51 = scmp.eq.s32.totalorder %s25, 0
    %p52 = por %p50, %p51
    %s54 = sadd.s32 %s53, 1
    %p57 = scmp.eq.s32.totalorder %s19, 2
    %p58 = scmp.ne.s32.totalorder %s53, %s55
    %p59 = scmp.eq.s32.totalorder %s19, 0
    %p60 = por %p58, %p59
    %p61 = scmp.ne.s32.totalorder %s53, %s55
    %p62 = scmp.eq.s32.totalorder %s24, 2
    %p63 = por %p61, %p62
    %p64 = scmp.ne.s32.totalorder %s55, %s56
    %p65 = scmp.eq.s32.totalorder %s24, 0
    %p66 = por %p64, %p65
    %p67 = scmp.ne.s32.totalorder %s55, %s56
    %p68 = scmp.eq.s32.totalorder %s25, 2
    %p69 = por %p67, %p68
    %p71 = scmp.ne.s32.totalorder %s56, %s70
    %p72 = scmp.eq.s32.totalorder %s25, 0
    %p73 = por %p71, %p72
    %s75 = sadd.s32 %s74, 1
    %p78 = scmp.eq.s32.totalorder %s19, 2
    %p79 = scmp.ne.s32.totalorder %s74, %s76
    %p80 = scmp.eq.s32.totalorder %s19, 0
    %p81 = por %p79, %p80
    %p82 = scmp.ne.s32.totalorder %s74, %s76
    %p83 = scmp.eq.s32.totalorder %s24, 2
    %p84 = por %p82, %p83
    %p85 = scmp.ne.s32.totalorder %s76, %s77
    %p86 = scmp.eq.s32.totalorder %s24, 0
    %p87 = por %p85, %p86
    %p88 = scmp.ne.s32.totalorder %s76, %s77
    %p89 = scmp.eq.s32.totalorder %s25, 2
    %p90 = por %p88, %p89
    %p92 = scmp.ne.s32.totalorder %s77, %s91
    %p93 = scmp.eq.s32.totalorder %s25, 0
    %p94 = por %p92, %p93
    %s96 = sadd.s32 %s95, 1
    %p99 = scmp.eq.s32.totalorder %s19, 2
    %p100 = scmp.ne.s32.totalorder %s95, %s97
    %p101 = scmp.eq.s32.totalorder %s19, 0
    %p102 = por %p100, %p101
    %p103 = scmp.ne.s32.totalorder %s95, %s97
    %p104 = scmp.eq.s32.totalorder %s24, 2
    %p105 = por %p103, %p104
    %p106 = scmp.ne.s32.totalorder %s97, %s98
    %p107 = scmp.eq.s32.totalorder %s24, 0
    %p108 = por %p106, %p107
    %p109 = scmp.ne.s32.totalorder %s97, %s98
    %p110 = scmp.eq.s32.totalorder %s25, 2
    %p111 = por %p109, %p110
    %p113 = scmp.ne.s32.totalorder %s98, %s112
    %p114 = scmp.eq.s32.totalorder %s25, 0
    %p115 = por %p113, %p114
    %s117 = sadd.s32 %s116, 1
    %p120 = scmp.eq.s32.totalorder %s19, 2
    %p121 = scmp.ne.s32.totalorder %s116, %s118
    %p122 = scmp.eq.s32.totalorder %s19, 0
    %p123 = por %p121, %p122
    %p124 = scmp.ne.s32.totalorder %s116, %s118
    %p125 = scmp.eq.s32.totalorder %s24, 2
    %p126 = por %p124, %p125
    %p127 = scmp.ne.s32.totalorder %s118, %s119
    %p128 = scmp.eq.s32.totalorder %s24, 0
    %p129 = por %p127, %p128
    %p130 = scmp.ne.s32.totalorder %s118, %s119
    %p131 = scmp.eq.s32.totalorder %s25, 2
    %p132 = por %p130, %p131
    %p134 = scmp.ne.s32.totalorder %s119, %s133
    %p135 = scmp.eq.s32.totalorder %s25, 0
    %p136 = por %p134, %p135
    %s138 = sadd.s32 %s137, 1
    %p141 = scmp.eq.s32.totalorder %s19, 2
    %p142 = scmp.ne.s32.totalorder %s137, %s139
    %p143 = scmp.eq.s32.totalorder %s19, 0
    %p144 = por %p142, %p143
    %p145 = scmp.ne.s32.totalorder %s137, %s139
    %p146 = scmp.eq.s32.totalorder %s24, 2
    %p147 = por %p145, %p146
    %p148 = scmp.ne.s32.totalorder %s139, %s140
    %p149 = scmp.eq.s32.totalorder %s24, 0
    %p150 = por %p148, %p149
    %p151 = scmp.ne.s32.totalorder %s139, %s140
    %p152 = scmp.eq.s32.totalorder %s25, 2
    %p153 = por %p151, %p152
    %p155 = scmp.ne.s32.totalorder %s140, %s154
    %p156 = scmp.eq.s32.totalorder %s25, 0
    %p157 = por %p155, %p156
    %s159 = sadd.s32 %s158, 1
    %p162 = scmp.eq.s32.totalorder %s19, 2
    %p163 = scmp.ne.s32.totalorder %s158, %s160
    %p164 = scmp.eq.s32.totalorder %s19, 0
    %p165 = por %p163, %p164
    %p166 = scmp.ne.s32.totalorder %s158, %s160
    %p167 = scmp.eq.s32.totalorder %s24, 2
    %p168 = por %p166, %p167
    %p169 = scmp.ne.s32.totalorder %s160, %s161
    %p170 = scmp.eq.s32.totalorder %s24, 0
    %p171 = por %p169, %p170
    %p172 = scmp.ne.s32.totalorder %s160, %s161
    %p173 = scmp.eq.s32.totalorder %s25, 2
    %p174 = por %p172, %p173
    %p176 = scmp.ne.s32.totalorder %s161, %s175
    %p177 = scmp.eq.s32.totalorder %s25, 0
    %p178 = por %p176, %p177
    %s180 = sadd.s32 %s179, 1
    %p183 = scmp.eq.s32.totalorder %s19, 2
    %p184 = scmp.ne.s32.totalorder %s179, %s181
    %p185 = scmp.eq.s32.totalorder %s19, 0
    %p186 = por %p184, %p185
    %p187 = scmp.ne.s32.totalorder %s179, %s181
    %p188 = scmp.eq.s32.totalorder %s24, 2
    %p189 = por %p187, %p188
    %p190 = scmp.ne.s32.totalorder %s181, %s182
    %p191 = scmp.eq.s32.totalorder %s24, 0
    %p192 = por %p190, %p191
    %p193 = scmp.ne.s32.totalorder %s181, %s182
    %p194 = scmp.eq.s32.totalorder %s25, 2
    %p195 = por %p193, %p194
    %p197 = scmp.ne.s32.totalorder %s182, %s196
    %p198 = scmp.eq.s32.totalorder %s25, 0
    %p199 = por %p197, %p198
    %s201 = sadd.s32 %s200, 1
    %p204 = scmp.eq.s32.totalorder %s19, 2
    %p205 = scmp.ne.s32.totalorder %s200, %s202
    %p206 = scmp.eq.s32.totalorder %s19, 0
    %p207 = por %p205, %p206
    %p208 = scmp.ne.s32.totalorder %s200, %s202
    %p209 = scmp.eq.s32.totalorder %s24, 2
    %p210 = por %p208, %p209
    %p211 = scmp.ne.s32.totalorder %s202, %s203
    %p212 = scmp.eq.s32.totalorder %s24, 0
    %p213 = por %p211, %p212
    %p214 = scmp.ne.s32.totalorder %s202, %s203
    %p215 = scmp.eq.s32.totalorder %s25, 2
    %p216 = por %p214, %p215
    %p218 = scmp.ne.s32.totalorder %s203, %s217
    %p219 = scmp.eq.s32.totalorder %s25, 0
    %p220 = por %p218, %p219
    %s222 = sadd.s32 %s221, 1
    %p225 = scmp.eq.s32.totalorder %s19, 2
    %p226 = scmp.ne.s32.totalorder %s221, %s223
    %p227 = scmp.eq.s32.totalorder %s19, 0
    %p228 = por %p226, %p227
    %p229 = scmp.ne.s32.totalorder %s221, %s223
    %p230 = scmp.eq.s32.totalorder %s24, 2
    %p231 = por %p229, %p230
    %p232 = scmp.ne.s32.totalorder %s223, %s224
    %p233 = scmp.eq.s32.totalorder %s24, 0
    %p234 = por %p232, %p233
    %p235 = scmp.ne.s32.totalorder %s223, %s224
    %p236 = scmp.eq.s32.totalorder %s25, 2
    %p237 = por %p235, %p236
    %p239 = scmp.ne.s32.totalorder %s224, %s238
    %p240 = scmp.eq.s32.totalorder %s25, 0
    %p241 = por %p239, %p240
    %s243 = sadd.s32 %s242, 1
    %p246 = scmp.eq.s32.totalorder %s19, 2
    %p247 = scmp.ne.s32.totalorder %s242, %s244
    %p248 = scmp.eq.s32.totalorder %s19, 0
    %p249 = por %p247, %p248
    %p250 = scmp.ne.s32.totalorder %s242, %s244
    %p251 = scmp.eq.s32.totalorder %s24, 2
    %p252 = por %p250, %p251
    %p253 = scmp.ne.s32.totalorder %s244, %s245
    %p254 = scmp.eq.s32.totalorder %s24, 0
    %p255 = por %p253, %p254
    %p256 = scmp.ne.s32.totalorder %s244, %s245
    %p257 = scmp.eq.s32.totalorder %s25, 2
    %p258 = por %p256, %p257
    %p260 = scmp.ne.s32.totalorder %s245, %s259
    %p261 = scmp.eq.s32.totalorder %s25, 0
    %p262 = por %p260, %p261
    %s263 = ssub.s32 %s19, %s26
    %p264 = scmp.eq.s32.totalorder %s263, 0
    %s266 = sadd.s32 %s265, 1
    %s267 = scalar_select %p264, %s265, %s266
    %p270 = pneg %p264
    %p271 = scmp.eq.s32.totalorder %s19, 2
    %p272 = por %p270, %p271
    %p273 = scmp.ne.s32.totalorder %s265, %s268
    %p274 = scmp.eq.s32.totalorder %s19, 0
    %p275 = por %p273, %p274
    %p276 = scmp.ne.s32.totalorder %s265, %s268
    %p277 = scmp.eq.s32.totalorder %s24, 2
    %p278 = por %p276, %p277
    %p279 = scmp.ne.s32.totalorder %s268, %s269
    %p280 = scmp.eq.s32.totalorder %s24, 0
    %p281 = por %p279, %p280
    %p282 = scmp.ne.s32.totalorder %s268, %s269
    %p283 = scmp.eq.s32.totalorder %s25, 2
    %p284 = por %p282, %p283
    %p286 = scmp.ne.s32.totalorder %s269, %s285
    %p287 = scmp.eq.s32.totalorder %s25, 0
    %p288 = por %p286, %p287
    %p289 = scmp.le.s32.totalorder 1, %s19
    %p290 = scmp.lt.s32.totalorder %s19, 4
    %p291 = pnand %p289, %p290
    %p292 = pneg %p291
    // Predicated region
    $region9: #{net_forward.1} parent=5 // pred_check
      _
    $region10: #{net_forward.1} parent=5 // pred_check_branch
      %294 = sbr.rel (%p291) target = $region12
    $region11: #{net_forward.1} parent=5 // pred_region
      %s295 = ssub.s32 %s19, 1
      // Predicated region
      $region13: #{net_forward.1} parent=11 // pred_check
        %p296 = pneg %p66
      $region14: #{net_forward.1} parent=11 // pred_check_branch
        %298 = sbr.rel (%p296) target = $region16
      $region15: #{net_forward.1} parent=11 // pred_region
        _
      $region16: #{net_forward.1} parent=11 // pred_fallthru
        _
      // Predicated region
      $region17: #{net_forward.1} parent=11 // pred_check
        %p299 = pneg %p87
      $region18: #{net_forward.1} parent=11 // pred_check_branch
        %301 = sbr.rel (%p299) target = $region20
      $region19: #{net_forward.1} parent=11 // pred_region
        _
      $region20: #{net_forward.1} parent=11 // pred_fallthru
        _
      // Predicated region
      $region21: #{net_forward.1} parent=11 // pred_check
        %p302 = pneg %p108
      $region22: #{net_forward.1} parent=11 // pred_check_branch
        %304 = sbr.rel (%p302) target = $region24
      $region23: #{net_forward.1} parent=11 // pred_region
        _
      $region24: #{net_forward.1} parent=11 // pred_fallthru
        _
      // Predicated region
      $region25: #{net_forward.1} parent=11 // pred_check
        %p305 = pneg %p129
      $region26: #{net_forward.1} parent=11 // pred_check_branch
        %307 = sbr.rel (%p305) target = $region28
      $region27: #{net_forward.1} parent=11 // pred_region
        _
      $region28: #{net_forward.1} parent=11 // pred_fallthru
        _
      // Predicated region
      $region29: #{net_forward.1} parent=11 // pred_check
        %p308 = pneg %p150
      $region30: #{net_forward.1} parent=11 // pred_check_branch
        %310 = sbr.rel (%p308) target = $region32
      $region31: #{net_forward.1} parent=11 // pred_region
        _
      $region32: #{net_forward.1} parent=11 // pred_fallthru
        _
      // Predicated region
      $region33: #{net_forward.1} parent=11 // pred_check
        %p311 = pneg %p171
      $region34: #{net_forward.1} parent=11 // pred_check_branch
        %313 = sbr.rel (%p311) target = $region36
      $region35: #{net_forward.1} parent=11 // pred_region
        _
      $region36: #{net_forward.1} parent=11 // pred_fallthru
        _
      // Predicated region
      $region37: #{net_forward.1} parent=11 // pred_check
        %p314 = pneg %p192
      $region38: #{net_forward.1} parent=11 // pred_check_branch
        %316 = sbr.rel (%p314) target = $region40
      $region39: #{net_forward.1} parent=11 // pred_region
        _
      $region40: #{net_forward.1} parent=11 // pred_fallthru
        _
      // Predicated region
      $region41: #{net_forward.1} parent=11 // pred_check
        %p317 = pneg %p213
      $region42: #{net_forward.1} parent=11 // pred_check_branch
        %319 = sbr.rel (%p317) target = $region44
      $region43: #{net_forward.1} parent=11 // pred_region
        _
      $region44: #{net_forward.1} parent=11 // pred_fallthru
        _
      // Predicated region
      $region45: #{net_forward.1} parent=11 // pred_check
        %p320 = pneg %p234
      $region46: #{net_forward.1} parent=11 // pred_check_branch
        %322 = sbr.rel (%p320) target = $region48
      $region47: #{net_forward.1} parent=11 // pred_region
        _
      $region48: #{net_forward.1} parent=11 // pred_fallthru
        _
      // Predicated region
      $region49: #{net_forward.1} parent=11 // pred_check
        %p323 = pneg %p255
      $region50: #{net_forward.1} parent=11 // pred_check_branch
        %325 = sbr.rel (%p323) target = $region52
      $region51: #{net_forward.1} parent=11 // pred_region
        _
      $region52: #{net_forward.1} parent=11 // pred_fallthru
        _
    $region12: #{net_forward.1} parent=5 // pred_fallthru
      _
    %p326 = scmp.lt.s32.totalorder %s19, 3
    // Predicated region
    $region53: #{net_forward.1} parent=5 // pred_check
      %p327 = pneg %p326
    $region54: #{net_forward.1} parent=5 // pred_check_branch
      %329 = sbr.rel (%p327) target = $region56
    $region55: #{net_forward.1} parent=5 // pred_region
      // Predicated region
      $region57: #{net_forward.1} parent=55 // pred_check
        %p330 = pneg %p39
      $region58: #{net_forward.1} parent=55 // pred_check_branch
        %332 = sbr.rel (%p330) target = $region60
      $region59: #{net_forward.1} parent=55 // pred_region
        %p333 = scmp.lt.s32.totalorder %s19, 2
        %s334 = scalar_select %p333, %s19, 2
        %s335 = scalar_lea.vmem %s0, %s334
      $region60: #{net_forward.1} parent=55 // pred_fallthru
        _
    $region56: #{net_forward.1} parent=5 // pred_fallthru
      _
    %p336 = scmp.le.s32.totalorder 1, %s19
    %p337 = scmp.lt.s32.totalorder %s19, 4
    %p338 = pnand %p336, %p337
    %p339 = pneg %p338
    // Predicated region
    $region61: #{net_forward.1} parent=5 // pred_check
      _
    $region62: #{net_forward.1} parent=5 // pred_check_branch
      %341 = sbr.rel (%p338) target = $region64
    $region63: #{net_forward.1} parent=5 // pred_region
      %s342 = ssub.s32 %s19, 1
      %p343 = scmp.lt.s32.totalorder %s24, 2
      %s344 = scalar_select %p343, %s24, 2
      %s345 = scalar_lea.vmem %s0, %s344
      %p346 = pneg %p45
      %p347 = pneg %p42
      %p348 = pneg %p66
      %p349 = pneg %p63
      %p350 = pneg %p87
      %p351 = pneg %p84
      %p352 = pneg %p108
      %p353 = pneg %p105
      %p354 = pneg %p129
      %p355 = pneg %p126
      %p356 = pneg %p150
      %p357 = pneg %p147
      %p358 = pneg %p171
      %p359 = pneg %p168
      %p360 = pneg %p192
      %p361 = pneg %p189
      %p362 = pneg %p213
      %p363 = pneg %p210
      %p364 = pneg %p234
      %p365 = pneg %p231
      %p366 = pneg %p255
      %p367 = pneg %p252
      %p368 = pneg %p281
      %p369 = pneg %p278
      %p370 = scmp.lt.s32.totalorder %s24, 2
      %s371 = scalar_select %p370, %s24, 2
      %s372 = scalar_lea.vmem %s11, %s371
      %p373 = scmp.lt.s32.totalorder %s24, 2
      %s374 = scalar_select %p373, %s24, 2
      %s375 = scalar_lea.vmem %s0, %s374
      %p376 = scmp.lt.s32.totalorder %s24, 2
      %s377 = scalar_select %p376, %s24, 2
      %s378 = scalar_lea.vmem %s11, %s377
      %v379 = vld [vmem:[%s375] sm:$0x1]
      %v380 = vld [vmem:[%s1] sm:$0xff]
      %v381 = vld [vmem:[%s1 + $0x8] sm:$0xff]
      %v382 = vld [vmem:[%s1 + $0x10] sm:$0xff]
      %v383 = vld [vmem:[%s1 + $0x18] sm:$0xff]
      %385 = vset.pattern.permute.xlu0 0
      %386 = vperm.xlu0 %385, %v380
      %v387 = vpop.permute.xlu0 %386
      %390 = vset.pattern.permute.xlu0 0
      %391 = vperm.xlu0 %390, %v381
      %v392 = vpop.permute.xlu0 %391
      %395 = vset.pattern.permute.xlu0 0
      %396 = vperm.xlu0 %395, %v382
      %v397 = vpop.permute.xlu0 %396
      %400 = vset.pattern.permute.xlu0 0
      %401 = vperm.xlu0 %400, %v383
      %v402 = vpop.permute.xlu0 %401
      %v405 = vlaneseq
      %v406 = vshrl.u32 %v405, 7
      %v407 = vsub.s32 0, %v406
      %v408 = vrot.slane %v379, %v407
      %v410 = vmul.f32 %v387, %v408
      %v411 = vmul.f32 %v392, %v408
      %v412 = vmul.f32 %v397, %v408
      %v413 = vmul.f32 %v402, %v408
      %v414 = vld [vmem:[%s2] sm:$0xff]
      %v415 = vld [vmem:[%s2 + $0x8] sm:$0xff]
      %v416 = vld [vmem:[%s2 + $0x10] sm:$0xff]
      %v417 = vld [vmem:[%s2 + $0x18] sm:$0xff]
      %419 = vset.pattern.permute.xlu0 0
      %420 = vperm.xlu0 %419, %v414
      %v421 = vpop.permute.xlu0 %420
      %424 = vset.pattern.permute.xlu0 0
      %425 = vperm.xlu0 %424, %v415
      %v426 = vpop.permute.xlu0 %425
      %429 = vset.pattern.permute.xlu0 0
      %430 = vperm.xlu0 %429, %v416
      %v431 = vpop.permute.xlu0 %430
      %434 = vset.pattern.permute.xlu0 0
      %435 = vperm.xlu0 %434, %v417
      %v436 = vpop.permute.xlu0 %435
      %v438 = vadd.f32 %v410, %v421
      %v439 = vadd.f32 %v411, %v426
      %v440 = vadd.f32 %v412, %v431
      %v441 = vadd.f32 %v413, %v436
      %v442 = vmax.f32 %v438, 0.0
      %v443 = vmax.f32 %v439, 0.0
      %v444 = vmax.f32 %v440, 0.0
      %v445 = vmax.f32 %v441, 0.0
      %v446 = vld [vmem:[%s3] sm:$0xff]
      %v447 = vld [vmem:[%s3 + $0x8] sm:$0xff]
      %v448 = vld [vmem:[%s3 + $0x10] sm:$0xff]
      %v449 = vld [vmem:[%s3 + $0x18] sm:$0xff]
      %v450 = vld [vmem:[%s4] sm:$0xff]
      %v451 = vld [vmem:[%s4 + $0x8] sm:$0xff]
      %v452 = vld [vmem:[%s4 + $0x10] sm:$0xff]
      %v453 = vld [vmem:[%s4 + $0x18] sm:$0xff]
      %455 = vset.pattern.permute.xlu0 0
      %456 = vperm.xlu0 %455, %v450
      %v457 = vpop.permute.xlu0 %456
      %460 = vset.pattern.permute.xlu0 0
      %461 = vperm.xlu0 %460, %v451
      %v462 = vpop.permute.xlu0 %461
      %465 = vset.pattern.permute.xlu0 0
      %466 = vperm.xlu0 %465, %v452
      %v467 = vpop.permute.xlu0 %466
      %470 = vset.pattern.permute.xlu0 0
      %471 = vperm.xlu0 %470, %v453
      %v472 = vpop.permute.xlu0 %471
      %vm474 = vcmask 261120
      %v476 = vsel %vm474, %v446, 0
      %v479 = vsel %vm474, %v447, 0
      %v482 = vsel %vm474, %v448, 0
      %v485 = vsel %vm474, %v449, 0
      %487 = vmatprep.subr.mxu0 0.0
      %488 = vmatpush1.msra.mxu0 %v442
      %489 = vmatprep.subr.mxu0 0.0
      %490 = vmatpush1.msra.mxu0 %v443
      %491 = vmatprep.subr.mxu0 0.0
      %492 = vmatpush1.msra.mxu0 %v444
      %493 = vmatprep.subr.mxu0 0.0
      %494 = vmatpush1.msra.mxu0 %v445
      %495 = vmatprep.subr.mxu0 0.0
      %496 = vmatpush1.msra.mxu0 0.0
      %497 = vmatprep.subr.mxu0 0.0
      %498 = vmatpush1.msra.mxu0 0.0
      %499 = vmatprep.subr.mxu0 0.0
      %500 = vmatpush1.msra.mxu0 0.0
      %501 = vmatprep.subr.mxu0 0.0
      %502 = vmatpush1.msra.mxu0 0.0
      %503 = vmatprep.subr.mxu0 0.0
      %504 = vmatpush1.msra.mxu0 0.0
      %505 = vmatprep.subr.mxu0 0.0
      %506 = vmatpush1.msra.mxu0 0.0
      %507 = vmatprep.subr.mxu0 0.0
      %508 = vmatpush1.msra.mxu0 0.0
      %509 = vmatprep.subr.mxu0 0.0
      %510 = vmatpush1.msra.mxu0 0.0
      %511 = vmatprep.subr.mxu0 0.0
      %512 = vmatpush1.msra.mxu0 0.0
      %513 = vmatprep.subr.mxu0 0.0
      %514 = vmatpush1.msra.mxu0 0.0
      %515 = vmatprep.subr.mxu0 0.0
      %516 = vmatpush1.msra.mxu0 0.0
      %517 = vmatprep.subr.mxu0 0.0
      %518 = vmatpush1.msra.mxu0 0.0
      %519 = vmatprep.subr.mxu0 0.0
      %520 = vmatpush1.msra.mxu0 0.0
      %521 = vmatprep.subr.mxu0 0.0
      %522 = vmatpush1.msra.mxu0 0.0
      %523 = vmatprep.subr.mxu0 0.0
      %524 = vmatpush1.msra.mxu0 0.0
      %525 = vmatprep.subr.mxu0 0.0
      %526 = vmatpush1.msra.mxu0 0.0
      %527 = vmatprep.subr.mxu0 0.0
      %528 = vmatpush1.msra.mxu0 0.0
      %529 = vmatprep.subr.mxu0 0.0
      %530 = vmatpush1.msra.mxu0 0.0
      %531 = vmatprep.subr.mxu0 0.0
      %532 = vmatpush1.msra.mxu0 0.0
      %533 = vmatprep.subr.mxu0 0.0
      %534 = vmatpush1.msra.mxu0 0.0
      %535 = vmatprep.subr.mxu0 0.0
      %536 = vmatpush1.msra.mxu0 0.0
      %537 = vmatprep.subr.mxu0 0.0
      %538 = vmatpush1.msra.mxu0 0.0
      %539 = vmatprep.subr.mxu0 0.0
      %540 = vmatpush1.msra.mxu0 0.0
      %541 = vmatprep.subr.mxu0 0.0
      %542 = vmatpush1.msra.mxu0 0.0
      %543 = vmatprep.subr.mxu0 0.0
      %544 = vmatpush1.msra.mxu0 0.0
      %545 = vmatprep.subr.mxu0 0.0
      %546 = vmatpush1.msra.mxu0 0.0
      %547 = vmatprep.subr.mxu0 0.0
      %548 = vmatpush1.msra.mxu0 0.0
      %549 = vmatprep.subr.mxu0 0.0
      %550 = vmatpush1.msra.mxu0 0.0
      %551 = vmatprep.mubr.f32.mxu0 0.0
      %552 = vmatmul.mubr.f32.gmra.mrb[0].mxu0 %v476
      %v553 = vpop.f32.mrb[0].mxu0
      %v554 = vadd.f32 %v457, %v553
      %v555 = vpop.f32.mrb[0].mxu0
      %556 = vmatprep.mubr.f32.mxu0 0.0
      %557 = vmatmul.mubr.f32.gmra.mrb[0].mxu0 %v479
      %v558 = vpop.f32.mrb[0].mxu0
      %v559 = vadd.f32 %v462, %v558
      %v560 = vpop.f32.mrb[0].mxu0
      %561 = vmatprep.mubr.f32.mxu0 0.0
      %562 = vmatmul.mubr.f32.gmra.mrb[0].mxu0 %v482
      %v563 = vpop.f32.mrb[0].mxu0
      %v564 = vadd.f32 %v467, %v563
      %v565 = vpop.f32.mrb[0].mxu0
      %566 = vmatprep.mubr.f32.mxu0 0.0
      %567 = vmatmul.mubr.f32.gmra.mrb[0].mxu0 %v485
      %v568 = vpop.f32.mrb[0].mxu0
      %v569 = vadd.f32 %v472, %v568
      %v570 = vpop.f32.mrb[0].mxu0
      %571 = vdwg.mxu0
      %v572 = vmax.f32 %v554, 0.0
      %v573 = vmax.f32 %v559, 0.0
      %v574 = vmax.f32 %v564, 0.0
      %v575 = vmax.f32 %v569, 0.0
      %v576 = vld [vmem:[%s5] sm:$0xff]
      %v577 = vld [vmem:[%s5 + $0x8] sm:$0xff]
      %v578 = vld [vmem:[%s5 + $0x10] sm:$0xff]
      %v579 = vld [vmem:[%s5 + $0x18] sm:$0xff]
      %v580 = vld [vmem:[%s6] sm:$0xff]
      %v581 = vld [vmem:[%s6 + $0x8] sm:$0xff]
      %v582 = vld [vmem:[%s6 + $0x10] sm:$0xff]
      %v583 = vld [vmem:[%s6 + $0x18] sm:$0xff]
      %585 = vset.pattern.permute.xlu0 0
      %586 = vperm.xlu0 %585, %v580
      %v587 = vpop.permute.xlu0 %586
      %590 = vset.pattern.permute.xlu0 0
      %591 = vperm.xlu0 %590, %v581
      %v592 = vpop.permute.xlu0 %591
      %595 = vset.pattern.permute.xlu0 0
      %596 = vperm.xlu0 %595, %v582
      %v597 = vpop.permute.xlu0 %596
      %600 = vset.pattern.permute.xlu0 0
      %601 = vperm.xlu0 %600, %v583
      %v602 = vpop.permute.xlu0 %601
      %v605 = vsel %vm474, %v576, 0
      %v608 = vsel %vm474, %v577, 0
      %v611 = vsel %vm474, %v578, 0
      %v614 = vsel %vm474, %v579, 0
      %616 = vmatprep.subr.mxu0 0.0
      %617 = vmatpush1.msra.mxu0 %v572
      %618 = vmatprep.subr.mxu0 0.0
      %619 = vmatpush1.msra.mxu0 %v573
      %620 = vmatprep.subr.mxu0 0.0
      %621 = vmatpush1.msra.mxu0 %v574
      %622 = vmatprep.subr.mxu0 0.0
      %623 = vmatpush1.msra.mxu0 %v575
      %624 = vmatprep.subr.mxu0 0.0
      %625 = vmatpush1.msra.mxu0 0.0
      %626 = vmatprep.subr.mxu0 0.0
      %627 = vmatpush1.msra.mxu0 0.0
      %628 = vmatprep.subr.mxu0 0.0
      %629 = vmatpush1.msra.mxu0 0.0
      %630 = vmatprep.subr.mxu0 0.0
      %631 = vmatpush1.msra.mxu0 0.0
      %632 = vmatprep.subr.mxu0 0.0
      %633 = vmatpush1.msra.mxu0 0.0
      %634 = vmatprep.subr.mxu0 0.0
      %635 = vmatpush1.msra.mxu0 0.0
      %636 = vmatprep.subr.mxu0 0.0
      %637 = vmatpush1.msra.mxu0 0.0
      %638 = vmatprep.subr.mxu0 0.0
      %639 = vmatpush1.msra.mxu0 0.0
      %640 = vmatprep.subr.mxu0 0.0
      %641 = vmatpush1.msra.mxu0 0.0
      %642 = vmatprep.subr.mxu0 0.0
      %643 = vmatpush1.msra.mxu0 0.0
      %644 = vmatprep.subr.mxu0 0.0
      %645 = vmatpush1.msra.mxu0 0.0
      %646 = vmatprep.subr.mxu0 0.0
      %647 = vmatpush1.msra.mxu0 0.0
      %648 = vmatprep.subr.mxu0 0.0
      %649 = vmatpush1.msra.mxu0 0.0
      %650 = vmatprep.subr.mxu0 0.0
      %651 = vmatpush1.msra.mxu0 0.0
      %652 = vmatprep.subr.mxu0 0.0
      %653 = vmatpush1.msra.mxu0 0.0
      %654 = vmatprep.subr.mxu0 0.0
      %655 = vmatpush1.msra.mxu0 0.0
      %656 = vmatprep.subr.mxu0 0.0
      %657 = vmatpush1.msra.mxu0 0.0
      %658 = vmatprep.subr.mxu0 0.0
      %659 = vmatpush1.msra.mxu0 0.0
      %660 = vmatprep.subr.mxu0 0.0
      %661 = vmatpush1.msra.mxu0 0.0
      %662 = vmatprep.subr.mxu0 0.0
      %663 = vmatpush1.msra.mxu0 0.0
      %664 = vmatprep.subr.mxu0 0.0
      %665 = vmatpush1.msra.mxu0 0.0
      %666 = vmatprep.subr.mxu0 0.0
      %667 = vmatpush1.msra.mxu0 0.0
      %668 = vmatprep.subr.mxu0 0.0
      %669 = vmatpush1.msra.mxu0 0.0
      %670 = vmatprep.subr.mxu0 0.0
      %671 = vmatpush1.msra.mxu0 0.0
      %672 = vmatprep.subr.mxu0 0.0
      %673 = vmatpush1.msra.mxu0 0.0
      %674 = vmatprep.subr.mxu0 0.0
      %675 = vmatpush1.msra.mxu0 0.0
      %676 = vmatprep.subr.mxu0 0.0
      %677 = vmatpush1.msra.mxu0 0.0
      %678 = vmatprep.subr.mxu0 0.0
      %679 = vmatpush1.msra.mxu0 0.0
      %680 = vmatprep.mubr.f32.mxu0 0.0
      %681 = vmatmul.mubr.f32.gmra.mrb[0].mxu0 %v605
      %v682 = vpop.f32.mrb[0].mxu0
      %v683 = vadd.f32 %v587, %v682
      %v684 = vpop.f32.mrb[0].mxu0
      %685 = vmatprep.mubr.f32.mxu0 0.0
      %686 = vmatmul.mubr.f32.gmra.mrb[0].mxu0 %v608
      %v687 = vpop.f32.mrb[0].mxu0
      %v688 = vadd.f32 %v592, %v687
      %v689 = vpop.f32.mrb[0].mxu0
      %690 = vmatprep.mubr.f32.mxu0 0.0
      %691 = vmatmul.mubr.f32.gmra.mrb[0].mxu0 %v611
      %v692 = vpop.f32.mrb[0].mxu0
      %v693 = vadd.f32 %v597, %v692
      %v694 = vpop.f32.mrb[0].mxu0
      %695 = vmatprep.mubr.f32.mxu0 0.0
      %696 = vmatmul.mubr.f32.gmra.mrb[0].mxu0 %v614
      %v697 = vpop.f32.mrb[0].mxu0
      %v698 = vadd.f32 %v602, %v697
      %v699 = vpop.f32.mrb[0].mxu0
      %700 = vdwg.mxu0
      %v701 = vmax.f32 %v683, 0.0
      %v702 = vmax.f32 %v688, 0.0
      %v703 = vmax.f32 %v693, 0.0
      %v704 = vmax.f32 %v698, 0.0
      %v705 = vld [vmem:[%s7] sm:$0xff]
      %v706 = vld [vmem:[%s7 + $0x8] sm:$0xff]
      %v707 = vld [vmem:[%s7 + $0x10] sm:$0xff]
      %v708 = vld [vmem:[%s7 + $0x18] sm:$0xff]
      %v709 = vld [vmem:[%s8] sm:$0xff]
      %v710 = vld [vmem:[%s8 + $0x8] sm:$0xff]
      %v711 = vld [vmem:[%s8 + $0x10] sm:$0xff]
      %v712 = vld [vmem:[%s8 + $0x18] sm:$0xff]
      %714 = vset.pattern.permute.xlu0 0
      %715 = vperm.xlu0 %714, %v709
      %v716 = vpop.permute.xlu0 %715
      %719 = vset.pattern.permute.xlu0 0
      %720 = vperm.xlu0 %719, %v710
      %v721 = vpop.permute.xlu0 %720
      %724 = vset.pattern.permute.xlu0 0
      %725 = vperm.xlu0 %724, %v711
      %v726 = vpop.permute.xlu0 %725
      %729 = vset.pattern.permute.xlu0 0
      %730 = vperm.xlu0 %729, %v712
      %v731 = vpop.permute.xlu0 %730
      %v734 = vsel %vm474, %v705, 0
      %v737 = vsel %vm474, %v706, 0
      %v740 = vsel %vm474, %v707, 0
      %v743 = vsel %vm474, %v708, 0
      %745 = vmatprep.subr.mxu0 0.0
      %746 = vmatpush1.msra.mxu0 %v701
      %747 = vmatprep.subr.mxu0 0.0
      %748 = vmatpush1.msra.mxu0 %v702
      %749 = vmatprep.subr.mxu0 0.0
      %750 = vmatpush1.msra.mxu0 %v703
      %751 = vmatprep.subr.mxu0 0.0
      %752 = vmatpush1.msra.mxu0 %v704
      %753 = vmatprep.subr.mxu0 0.0
      %754 = vmatpush1.msra.mxu0 0.0
      %755 = vmatprep.subr.mxu0 0.0
      %756 = vmatpush1.msra.mxu0 0.0
      %757 = vmatprep.subr.mxu0 0.0
      %758 = vmatpush1.msra.mxu0 0.0
      %759 = vmatprep.subr.mxu0 0.0
      %760 = vmatpush1.msra.mxu0 0.0
      %761 = vmatprep.subr.mxu0 0.0
      %762 = vmatpush1.msra.mxu0 0.0
      %763 = vmatprep.subr.mxu0 0.0
      %764 = vmatpush1.msra.mxu0 0.0
      %765 = vmatprep.subr.mxu0 0.0
      %766 = vmatpush1.msra.mxu0 0.0
      %767 = vmatprep.subr.mxu0 0.0
      %768 = vmatpush1.msra.mxu0 0.0
      %769 = vmatprep.subr.mxu0 0.0
      %770 = vmatpush1.msra.mxu0 0.0
      %771 = vmatprep.subr.mxu0 0.0
      %772 = vmatpush1.msra.mxu0 0.0
      %773 = vmatprep.subr.mxu0 0.0
      %774 = vmatpush1.msra.mxu0 0.0
      %775 = vmatprep.subr.mxu0 0.0
      %776 = vmatpush1.msra.mxu0 0.0
      %777 = vmatprep.subr.mxu0 0.0
      %778 = vmatpush1.msra.mxu0 0.0
      %779 = vmatprep.subr.mxu0 0.0
      %780 = vmatpush1.msra.mxu0 0.0
      %781 = vmatprep.subr.mxu0 0.0
      %782 = vmatpush1.msra.mxu0 0.0
      %783 = vmatprep.subr.mxu0 0.0
      %784 = vmatpush1.msra.mxu0 0.0
      %785 = vmatprep.subr.mxu0 0.0
      %786 = vmatpush1.msra.mxu0 0.0
      %787 = vmatprep.subr.mxu0 0.0
      %788 = vmatpush1.msra.mxu0 0.0
      %789 = vmatprep.subr.mxu0 0.0
      %790 = vmatpush1.msra.mxu0 0.0
      %791 = vmatprep.subr.mxu0 0.0
      %792 = vmatpush1.msra.mxu0 0.0
      %793 = vmatprep.subr.mxu0 0.0
      %794 = vmatpush1.msra.mxu0 0.0
      %795 = vmatprep.subr.mxu0 0.0
      %796 = vmatpush1.msra.mxu0 0.0
      %797 = vmatprep.subr.mxu0 0.0
      %798 = vmatpush1.msra.mxu0 0.0
      %799 = vmatprep.subr.mxu0 0.0
      %800 = vmatpush1.msra.mxu0 0.0
      %801 = vmatprep.subr.mxu0 0.0
      %802 = vmatpush1.msra.mxu0 0.0
      %803 = vmatprep.subr.mxu0 0.0
      %804 = vmatpush1.msra.mxu0 0.0
      %805 = vmatprep.subr.mxu0 0.0
      %806 = vmatpush1.msra.mxu0 0.0
      %807 = vmatprep.subr.mxu0 0.0
      %808 = vmatpush1.msra.mxu0 0.0
      %809 = vmatprep.mubr.f32.mxu0 0.0
      %810 = vmatmul.mubr.f32.gmra.mrb[0].mxu0 %v734
      %v811 = vpop.f32.mrb[0].mxu0
      %v812 = vadd.f32 %v716, %v811
      %v813 = vpop.f32.mrb[0].mxu0
      %814 = vmatprep.mubr.f32.mxu0 0.0
      %815 = vmatmul.mubr.f32.gmra.mrb[0].mxu0 %v737
      %v816 = vpop.f32.mrb[0].mxu0
      %v817 = vadd.f32 %v721, %v816
      %v818 = vpop.f32.mrb[0].mxu0
      %819 = vmatprep.mubr.f32.mxu0 0.0
      %820 = vmatmul.mubr.f32.gmra.mrb[0].mxu0 %v740
      %v821 = vpop.f32.mrb[0].mxu0
      %v822 = vadd.f32 %v726, %v821
      %v823 = vpop.f32.mrb[0].mxu0
      %824 = vmatprep.mubr.f32.mxu0 0.0
      %825 = vmatmul.mubr.f32.gmra.mrb[0].mxu0 %v743
      %v826 = vpop.f32.mrb[0].mxu0
      %v827 = vadd.f32 %v731, %v826
      %v828 = vpop.f32.mrb[0].mxu0
      %829 = vdwg.mxu0
      %v830 = vmax.f32 %v812, 0.0
      %v831 = vmax.f32 %v817, 0.0
      %v832 = vmax.f32 %v822, 0.0
      %v833 = vmax.f32 %v827, 0.0
      %v834 = vld [vmem:[%s9] sm:$0x1]
      %v835 = vld [vmem:[#allocation2] sm:$0x1]
      %837 = vset.pattern.permute.xlu0 0
      %838 = vperm.xlu0 %837, %v835
      %v839 = vpop.permute.xlu0 %838
      %v841 = vlaneseq
      %v842 = vshrl.u32 %v841, 7
      %v843 = vsub.s32 0, %v842
      %v844 = vrot.slane %v839, %v843
      %v846 = vsel %vm474, %v834, 0
      %848 = vmatprep.subr.mxu0 0.0
      %849 = vmatpush1.msra.mxu0 %v830
      %850 = vmatprep.subr.mxu0 0.0
      %851 = vmatpush1.msra.mxu0 %v831
      %852 = vmatprep.subr.mxu0 0.0
      %853 = vmatpush1.msra.mxu0 %v832
      %854 = vmatprep.subr.mxu0 0.0
      %855 = vmatpush1.msra.mxu0 %v833
      %856 = vmatprep.subr.mxu0 0.0
      %857 = vmatpush1.msra.mxu0 0.0
      %858 = vmatprep.subr.mxu0 0.0
      %859 = vmatpush1.msra.mxu0 0.0
      %860 = vmatprep.subr.mxu0 0.0
      %861 = vmatpush1.msra.mxu0 0.0
      %862 = vmatprep.subr.mxu0 0.0
      %863 = vmatpush1.msra.mxu0 0.0
      %864 = vmatprep.subr.mxu0 0.0
      %865 = vmatpush1.msra.mxu0 0.0
      %866 = vmatprep.subr.mxu0 0.0
      %867 = vmatpush1.msra.mxu0 0.0
      %868 = vmatprep.subr.mxu0 0.0
      %869 = vmatpush1.msra.mxu0 0.0
      %870 = vmatprep.subr.mxu0 0.0
      %871 = vmatpush1.msra.mxu0 0.0
      %872 = vmatprep.subr.mxu0 0.0
      %873 = vmatpush1.msra.mxu0 0.0
      %874 = vmatprep.subr.mxu0 0.0
      %875 = vmatpush1.msra.mxu0 0.0
      %876 = vmatprep.subr.mxu0 0.0
      %877 = vmatpush1.msra.mxu0 0.0
      %878 = vmatprep.subr.mxu0 0.0
      %879 = vmatpush1.msra.mxu0 0.0
      %880 = vmatprep.subr.mxu0 0.0
      %881 = vmatpush1.msra.mxu0 0.0
      %882 = vmatprep.subr.mxu0 0.0
      %883 = vmatpush1.msra.mxu0 0.0
      %884 = vmatprep.subr.mxu0 0.0
      %885 = vmatpush1.msra.mxu0 0.0
      %886 = vmatprep.subr.mxu0 0.0
      %887 = vmatpush1.msra.mxu0 0.0
      %888 = vmatprep.subr.mxu0 0.0
      %889 = vmatpush1.msra.mxu0 0.0
      %890 = vmatprep.subr.mxu0 0.0
      %891 = vmatpush1.msra.mxu0 0.0
      %892 = vmatprep.subr.mxu0 0.0
      %893 = vmatpush1.msra.mxu0 0.0
      %894 = vmatprep.subr.mxu0 0.0
      %895 = vmatpush1.msra.mxu0 0.0
      %896 = vmatprep.subr.mxu0 0.0
      %897 = vmatpush1.msra.mxu0 0.0
      %898 = vmatprep.subr.mxu0 0.0
      %899 = vmatpush1.msra.mxu0 0.0
      %900 = vmatprep.subr.mxu0 0.0
      %901 = vmatpush1.msra.mxu0 0.0
      %902 = vmatprep.subr.mxu0 0.0
      %903 = vmatpush1.msra.mxu0 0.0
      %904 = vmatprep.subr.mxu0 0.0
      %905 = vmatpush1.msra.mxu0 0.0
      %906 = vmatprep.subr.mxu0 0.0
      %907 = vmatpush1.msra.mxu0 0.0
      %908 = vmatprep.subr.mxu0 0.0
      %909 = vmatpush1.msra.mxu0 0.0
      %910 = vmatprep.subr.mxu0 0.0
      %911 = vmatpush1.msra.mxu0 0.0
      %912 = vmatprep.mubr.f32.mxu0 0.0
      %913 = vmatmul.mubr.f32.gmra.mrb[0].mxu0 %v846
      %v914 = vpop.f32.mrb[0].mxu0
      %v915 = vadd.f32 %v844, %v914
      %v916 = vpop.f32.mrb[0].mxu0
      %917 = vdwg.mxu0
      %918 = vst [vmem:[%s378] sm:$0x1] %v915
      %p919 = scmp.lt.s32.totalorder %s24, 2
      %s920 = scalar_select %p919, %s24, 2
      %s921 = scalar_lea.vmem %s11, %s920
      // Predicated region
      $region65: #{net_forward.1} parent=63 // pred_check
        %p922 = pneg %p278
      $region66: #{net_forward.1} parent=63 // pred_check_branch
        %924 = sbr.rel (%p922) target = $region68
      $region67: #{net_forward.1} parent=63 // pred_region
        _
      $region68: #{net_forward.1} parent=63 // pred_fallthru
        _
    $region64: #{net_forward.1} parent=5 // pred_fallthru
      _
    %p925 = scmp.le.s32.totalorder 2, %s19
    // Predicated region
    $region69: #{net_forward.1} parent=5 // pred_check
      %p926 = pneg %p925
    $region70: #{net_forward.1} parent=5 // pred_check_branch
      %928 = sbr.rel (%p926) target = $region72
    $region71: #{net_forward.1} parent=5 // pred_region
      %s929 = ssub.s32 %s19, 2
      // Predicated region
      $region73: #{net_forward.1} parent=71 // pred_check
        %p930 = pneg %p284
      $region74: #{net_forward.1} parent=71 // pred_check_branch
        %932 = sbr.rel (%p930) target = $region76
      $region75: #{net_forward.1} parent=71 // pred_region
        %p933 = scmp.lt.s32.totalorder %s25, 2
        %s934 = scalar_select %p933, %s25, 2
        %s935 = scalar_lea.vmem %s11, %s934
      $region76: #{net_forward.1} parent=71 // pred_fallthru
        _
    $region72: #{net_forward.1} parent=5 // pred_fallthru
      _
  $region6: #{net_forward.1} parent=0 // loop_footer
    %s23 = sadd.s32 1, %s19
  $region7: #{net_forward.1} parent=0 // loop_footer_branch
    %18 = sbr.rel target = $region3
  $region8: #{net_forward.1} parent=0 // loop_exit
    _

</llo_original>
